<compile_context>
chip_gen: v7x
topology: tpu7x:2x2x1
jax: 0.10.0
libtpu: 0.0.40
codegen_flags: <defaults>
</compile_context>

<pallas_src>
import jax
import jax.numpy as jnp
import numpy as np
from jax.experimental import pallas as pl
from jax.experimental.pallas import tpu as pltpu


def _round_up(x, m):
    return ((x + m - 1) // m) * m


def _fused_proj_kernel(x_ref, w_ref, b_ref, out_ref):
    """out = x @ W_comb + b_comb on one row tile.

    x / W_comb arrive in the MXU operand dtype (bf16 by default); accumulation
    and the bias add are f32; the output tile is written in f32.
    """
    acc = jnp.dot(x_ref[...], w_ref[...], preferred_element_type=jnp.float32)
    out_ref[...] = (acc + b_ref[...]).astype(out_ref.dtype)


def multihead_hollow_attention(query, key, value, mask, params, *, num_heads,
                               tile_rows=1024, matmul_dtype=jnp.bfloat16):
    """Forward pass of MultiheadHollowAttention.

    `mask` is accepted but unused (exactly as in the PyTorch module).  Because
    the hollow mask makes the attention matrix the identity, the output does
    not depend on `query`, `key`, Wq/bq or Wk/bk (assuming finite Q/K).
    """
    del query, key, mask, num_heads  # mathematically irrelevant to the output

    wq, bq, wk, bk, wv, bv, wo, bo = params
    del wq, bq, wk, bk

    B, S, D = value.shape
    N = B * S

    # ---- Host-side one-time weight fold (review item 1) -------------------
    # Done at HIGHEST precision so the f32 kernel path stays within 1e-5 of
    # the step-by-step reference.
    w_comb = jnp.matmul(wo.astype(jnp.float32), wv.astype(jnp.float32),
                        precision=jax.lax.Precision.HIGHEST).T        # (D, D)
    b_comb = (jnp.matmul(wo.astype(jnp.float32), bv.astype(jnp.float32),
                         precision=jax.lax.Precision.HIGHEST)
              + bo.astype(jnp.float32)).reshape(1, D)                 # (1, D)

    # No padding / slicing of the activations (review items 3 & 10): the
    # (B, S, D) -> (B*S, D) reshape is free, blocks use full-array extents on
    # the lane dim, and an uneven last row tile is handled by Pallas.
    in_dt = np.dtype(matmul_dtype)
    x = value.reshape(N, D).astype(matmul_dtype)
    w_comb = w_comb.astype(matmul_dtype)

    # ---- Row tiling (review items 5 & 8) -----------------------------------
    # Sublane alignment: 8 rows for 32-bit operands, 16 for 16-bit operands.
    sub = 16 if in_dt.itemsize == 2 else 8
    tr_two_steps = _round_up(max(1, pl.cdiv(N, 2)), sub)   # >= 2 grid steps
    TR = max(sub, min(_round_up(tile_rows, sub), tr_two_steps,
                      _round_up(N, sub)))
    grid = (pl.cdiv(N, TR),)

    # ---- BlockSpecs ---------------------------------------------------------
    x_spec = pl.BlockSpec((TR, D), lambda i: (i, 0))
    out_spec = pl.BlockSpec((TR, D), lambda i: (i, 0))

    # Weights / bias: constant index_map -> VMEM-resident across the grid.
    # Single-buffer them (review item 2) once large enough for the duplicate
    # buffer to matter; tiny weights keep the default (best-tested) path.
    w_bytes = D * D * in_dt.itemsize
    if w_bytes >= (1 << 20):
        w_spec = pl.BlockSpec((D, D), lambda i: (0, 0),
                              pipeline_mode=pl.Buffered(1))
        b_spec = pl.BlockSpec((1, D), lambda i: (0, 0),
                              pipeline_mode=pl.Buffered(1))
    else:
        w_spec = pl.BlockSpec((D, D), lambda i: (0, 0))
        b_spec = pl.BlockSpec((1, D), lambda i: (0, 0))

    # ---- VMEM budget guard (review items 6 & 7) -----------------------------
    lane_d = _round_up(D, 128)
    sub_d = _round_up(D, sub)
    vmem_need = (2 * TR * lane_d * in_dt.itemsize      # x, double-buffered
                 + 2 * TR * lane_d * 4                 # out f32, double-buffered
                 + (1 if w_bytes >= (1 << 20) else 2) * sub_d * lane_d * in_dt.itemsize
                 + 2 * 8 * lane_d * 4)                 # bias
    vmem_limit = None
    if vmem_need + (2 << 20) > (32 << 20):
        vmem_limit = min(vmem_need + (4 << 20), 96 << 20)
    # TODO(synk): for very large hidden dims (f32 D >= ~2048) switch to a
    # (rows, n-tile, k-tile) accumulator grid instead of keeping the full
    # (D, D) folded weight VMEM-resident (v7x has only 64 MiB of VMEM).

    cost = pl.CostEstimate(
        flops=2 * N * D * D,
        transcendentals=0,
        bytes_accessed=N * D * (in_dt.itemsize + 4) + D * D * in_dt.itemsize + D * 4,
    )

    out = pl.pallas_call(
        _fused_proj_kernel,
        out_shape=jax.ShapeDtypeStruct((N, D), jnp.float32),
        grid_spec=pltpu.PrefetchScalarGridSpec(
            num_scalar_prefetch=0,
            grid=grid,
            in_specs=[x_spec, w_spec, b_spec],
            out_specs=out_spec,
        ),
        compiler_params=pltpu.CompilerParams(
            dimension_semantics=("parallel",),
            vmem_limit_bytes=vmem_limit),
        cost_estimate=cost,
    )(x, w_comb, b_comb)

    return out.reshape(B, S, D)


def _reference_jax(query, key, value, params, num_heads):
    """Pure-JAX reference mirroring the PyTorch forward step-by-step."""
    wq, bq, wk, bk, wv, bv, wo, bo = params
    B, S, D = query.shape
    HD = D // num_heads

    def proj(x, w, b):
        return x @ w.T + b

    q = proj(query, wq, bq).reshape(B, S, num_heads, HD).transpose(0, 2, 1, 3)
    k = proj(key, wk, bk).reshape(B, S, num_heads, HD).transpose(0, 2, 1, 3)
    v = proj(value, wv, bv).reshape(B, S, num_heads, HD).transpose(0, 2, 1, 3)

    scores = jnp.einsum('bhsd,bhtd->bhst', q, k) / jnp.sqrt(jnp.float32(HD))
    row = jnp.arange(S)[:, None]
    col = jnp.arange(S)[None, :]
    hollow = row != col
    scores = jnp.where(hollow[None, None], -jnp.inf, scores)
    attn = jax.nn.softmax(scores, axis=-1)
    out = jnp.einsum('bhst,bhtd->bhsd', attn, v)
    out = out.transpose(0, 2, 1, 3).reshape(B, S, D)
    return out @ wo.T + bo


def init_params(key, hidden_dim):
    """Synthetic init matching torch.nn.Linear shapes: W (out,in), b (out,)."""
    ks = jax.random.split(key, 8)
    scale = 1.0 / jnp.sqrt(jnp.float32(hidden_dim))

    def w(k):
        return jax.random.uniform(k, (hidden_dim, hidden_dim),
                                  jnp.float32, -scale, scale)

    def b(k):
        return jax.random.uniform(k, (hidden_dim,), jnp.float32, -scale, scale)

    return (w(ks[0]), b(ks[1]),   # query_projection
            w(ks[2]), b(ks[3]),   # key_projection
            w(ks[4]), b(ks[5]),   # value_projection
            w(ks[6]), b(ks[7]))   # final_projection


if __name__ == "__main__":
    B, S, D = 2, 8, 32
    NUM_HEADS = 4

    root = jax.random.PRNGKey(0)
    kq, kk, kv, kp = jax.random.split(root, 4)
    query = jax.random.normal(kq, (B, S, D), jnp.float32)
    key_in = jax.random.normal(kk, (B, S, D), jnp.float32)
    value = jax.random.normal(kv, (B, S, D), jnp.float32)
    mask = jnp.ones((B, S, S), jnp.float32)  # unused by the module's forward

    params = init_params(kp, D)
    ref = _reference_jax(query, key_in, value, params, NUM_HEADS)

    # Performance default: bf16 MXU operands, f32 accumulation (loose tol).
    out_bf16 = multihead_hollow_attention(query, key_in, value, mask, params,
                                          num_heads=NUM_HEADS)
    out_bf16 = jax.block_until_ready(out_bf16)
    assert out_bf16.shape == (B, S, D)
    assert jnp.allclose(out_bf16, ref, atol=3e-2, rtol=3e-2), \
        "bf16 path mismatch vs reference"

    # f32-operand path: verifies the identity-attention + weight-fold algebra
    # against the step-by-step reference at tight tolerance.
    out_f32 = multihead_hollow_attention(query, key_in, value, mask, params,
                                         num_heads=NUM_HEADS,
                                         matmul_dtype=jnp.float32)
    out_f32 = jax.block_until_ready(out_f32)
    assert jnp.allclose(out_f32, ref, atol=1e-5, rtol=1e-5), \
        "f32 path mismatch vs reference"

    print("KERNEL_OK")
</pallas_src>

<mosaic_0001>
module attributes {stable_mosaic.version = 11 : i64} {
  func.func @_fused_proj_kernel(%arg0: i32, %arg1: memref<16x32xbf16, #tpu.memory_space<vmem>>, %arg2: memref<32x32xbf16, #tpu.memory_space<vmem>>, %arg3: memref<1x32xf32, #tpu.memory_space<vmem>>, %arg4: memref<16x32xf32, #tpu.memory_space<vmem>>) attributes {dimension_semantics = [#tpu.dimension_semantics<parallel>], iteration_bounds = array<i64: 1>, scalar_prefetch = 0 : i64, scratch_operands = 0 : i64, tpu.core_type = #tpu.core_type<tc>, window_params = [{transform_indices = @transform_0, window_bounds = array<i64: 16, 32>}, {pipeline_mode = #tpu.pipeline_mode<synchronous>, transform_indices = @transform_1, window_bounds = array<i64: 32, 32>}, {pipeline_mode = #tpu.pipeline_mode<synchronous>, transform_indices = @transform_2, window_bounds = array<i64: 1, 32>}, {transform_indices = @transform_3, window_bounds = array<i64: 16, 32>}]} {
    %c0 = arith.constant 0 : index
    %c0_0 = arith.constant 0 : index
    %0 = vector.load %arg1[%c0, %c0_0] : memref<16x32xbf16, #tpu.memory_space<vmem>>, vector<16x32xbf16>
    %c0_1 = arith.constant 0 : index
    %c0_2 = arith.constant 0 : index
    %1 = vector.load %arg2[%c0_1, %c0_2] : memref<32x32xbf16, #tpu.memory_space<vmem>>, vector<32x32xbf16>
    %cst = arith.constant dense<0.000000e+00> : vector<16x32xf32>
    %2 = tpu.matmul %0, %1, %cst {dimension_numbers = #tpu.dot_dimension_numbers<[1], [0], [0], [1], [0, 0, 1, 1], [], []>} : vector<16x32xbf16>, vector<32x32xbf16>, vector<16x32xf32> -> vector<16x32xf32>
    %c0_3 = arith.constant 0 : index
    %c0_4 = arith.constant 0 : index
    %3 = vector.load %arg3[%c0_3, %c0_4] : memref<1x32xf32, #tpu.memory_space<vmem>>, vector<1x32xf32>
    %4 = vector.broadcast %3 : vector<1x32xf32> to vector<16x32xf32>
    %5 = arith.addf %2, %4 : vector<16x32xf32>
    %c0_5 = arith.constant 0 : index
    %c0_6 = arith.constant 0 : index
    %6 = vector.load %arg4[%c0_5, %c0_6] : memref<16x32xf32, #tpu.memory_space<vmem>>, vector<16x32xf32>
    tpu.vector_store %arg4[%c0_5, %c0_6], %5 {strides = array<i32>} : memref<16x32xf32, #tpu.memory_space<vmem>>, vector<16x32xf32>,
    return
  }
  func.func @transform_0(%arg0: i32) -> (i32, i32) {
    %c0_i32 = arith.constant 0 : i32
    %c0_i32_0 = arith.constant 0 : i32
    return %arg0, %c0_i32 : i32, i32
  }
  func.func @transform_1(%arg0: i32) -> (i32, i32) {
    %c0_i32 = arith.constant 0 : i32
    %c0_i32_0 = arith.constant 0 : i32
    %c0_i32_1 = arith.constant 0 : i32
    return %c0_i32, %c0_i32_0 : i32, i32
  }
  func.func @transform_2(%arg0: i32) -> (i32, i32) {
    %c0_i32 = arith.constant 0 : i32
    %c0_i32_0 = arith.constant 0 : i32
    %c0_i32_1 = arith.constant 0 : i32
    return %c0_i32, %c0_i32_0 : i32, i32
  }
  func.func @transform_3(%arg0: i32) -> (i32, i32) {
    %c0_i32 = arith.constant 0 : i32
    %c0_i32_0 = arith.constant 0 : i32
    return %arg0, %c0_i32 : i32, i32
  }
}

</mosaic_0001>

<llo_original>
// kernel: tpu_custom_call.1
$region0: #{tpu_custom_call.1}
  #allocation0 [shape = 'u32[]', space=smem, size = 0x4, offset = 0x4, fixed_abs, tag = 'smem constant byte address 0x4 - core index']
  #allocation1 [shape = 'u32[144,128]{1,0:T(1,128)}', space=vmem, size = 0x12000, scoped, tag = 'internal scratch']
  %s0 = inlined_call_operand.hbm [shape: bf16[16,32], index: 0, kind: input, shape index: {}]
  %s1 = inlined_call_operand.hbm [shape: bf16[32,32], index: 1, kind: input, shape index: {}]
  %s2 = inlined_call_operand.vmem [shape: f32[1,32], index: 2, kind: input, shape index: {}]
  %s3 = inlined_call_operand.hbm [shape: f32[16,32], index: 3, kind: output, shape index: {}]
  %s4 = sld [smem:[#allocation0]]
  $region30: #{tpu_custom_call.1} parent=0
    _
  %s6 = ssub.s32 1, %s4
  %s7 = scalar_select 0, %s6, %s4
  $region1: #{tpu_custom_call.1} parent=0
    #allocation2 [shape = 'u8[4096]{0}', space=vmem, size = 0x1000, scoped, tag = 'input window, operand 0, single buffered']
    #allocation3 [shape = 's32[1]{0}', space=sflag, size = 0x4, scoped, tag = 'scoped memory for tpu_custom_call.1']
    #allocation4 [shape = 's32[1]{0}', space=sflag, size = 0x4, scoped, tag = 'scoped memory for tpu_custom_call.1']
    #allocation5 [shape = 'u8[8192]{0}', space=vmem, size = 0x2000, scoped, tag = 'input window, operand 1, single buffered']
    #allocation6 [shape = 's32[1]{0}', space=sflag, size = 0x4, scoped, tag = 'scoped memory for tpu_custom_call.1']
    #allocation7 [shape = 'u8[8192]{0}', space=vmem, size = 0x2000, scoped, tag = 'output window, operand 0, single buffered']
    %8 = vsyncpa [#allocation3], 0
    %9 = vsyncpa [#allocation6], 0
    %10 = vsyncpa [#allocation4], 0
    // Predicated region
    $region2: #{tpu_custom_call.1} parent=1 // pred_check
      _
    $region3: #{tpu_custom_call.1} parent=1 // pred_check_branch
      %12 = sbr.rel (0) target = $region5
    $region4: #{tpu_custom_call.1} parent=1 // pred_region
      %s14 = ssub.s32 128, 128
      %15 = vsyncadd [#allocation3], %s14
      %s16 = sshll.u32 [#allocation2], 4
      %s17 = int_to_ptr.vmem [resolvable:$true] %s16
      %22 = dma.hbm_to_vmem [thread:$0]  %s0, 128, %s17, [#allocation3], 64, 64, 4
    $region5: #{tpu_custom_call.1} parent=1 // pred_fallthru
      _
    // Predicated region
    $region6: #{tpu_custom_call.1} parent=1 // pred_check
      _
    $region7: #{tpu_custom_call.1} parent=1 // pred_check_branch
      %24 = sbr.rel (0) target = $region9
    $region8: #{tpu_custom_call.1} parent=1 // pred_region
      %s26 = ssub.s32 256, 256
      %27 = vsyncadd [#allocation6], %s26
      %s28 = sshll.u32 [#allocation5], 4
      %s29 = int_to_ptr.vmem [resolvable:$true] %s28
      %34 = dma.hbm_to_vmem [thread:$0]  %s1, 256, %s29, [#allocation6], 64, 64, 4
    $region9: #{tpu_custom_call.1} parent=1 // pred_fallthru
      _
    // Predicated region
    $region10: #{tpu_custom_call.1} parent=1 // pred_check
      _
    $region11: #{tpu_custom_call.1} parent=1 // pred_check_branch
      %36 = sbr.rel (0) target = $region13
    $region12: #{tpu_custom_call.1} parent=1 // pred_region
      _
    $region13: #{tpu_custom_call.1} parent=1 // pred_fallthru
      _
    // Predicated region
    $region14: #{tpu_custom_call.1} parent=1 // pred_check
      _
    $region15: #{tpu_custom_call.1} parent=1 // pred_check_branch
      %38 = sbr.rel (0) target = $region17
    $region16: #{tpu_custom_call.1} parent=1 // pred_region
      %39 = dma.done [#allocation3], 128
    $region17: #{tpu_custom_call.1} parent=1 // pred_fallthru
      _
    // Predicated region
    $region18: #{tpu_custom_call.1} parent=1 // pred_check
      _
    $region19: #{tpu_custom_call.1} parent=1 // pred_check_branch
      %41 = sbr.rel (0) target = $region21
    $region20: #{tpu_custom_call.1} parent=1 // pred_region
      %42 = dma.done [#allocation6], 256
    $region21: #{tpu_custom_call.1} parent=1 // pred_fallthru
      _
    %v44 = vld [vmem:[#allocation2] sm:$0xf]
    %v45 = vld [vmem:[#allocation2 + $0x4] sm:$0xf]
    %v46 = vld [vmem:[#allocation5] sm:$0xf]
    %v47 = vld [vmem:[#allocation5 + $0x4] sm:$0xf]
    %v48 = vld [vmem:[#allocation5 + $0x8] sm:$0xf]
    %v49 = vld [vmem:[#allocation5 + $0xc] sm:$0xf]
    %v50 = vld [vmem:[%s2] sm:$0x1]
    %v52 = vlaneseq
    %v53 = vshrl.u32 %v52, 7
    %v54 = vsub.s32 0, %v53
    %v55 = vrot.slane %v50, %v54
    %v59 = vunpack.c.l.b16 %v44
    %v60 = vunpack.c.l.b16 %v45
    %v61 = vpack.c.b16 %v60, %v59
    %v66 = vunpack.c.l.b16 %v46
    %v67 = vunpack.c.l.b16 %v47
    %v68 = vunpack.c.l.b16 %v48
    %v69 = vunpack.c.l.b16 %v49
    %v70 = vpack.c.b16 %v67, %v66
    %v71 = vpack.c.b16 %v69, %v68
    %vm74 = vcmask 261120
    %v76 = vsel %vm74, %v61, 0
    %78 = vmatprep.subr.bf16.mxu0 0
    %79 = vmatpush1.bf16.msra.mxu0 %v70
    %80 = vmatprep.subr.bf16.mxu0 0
    %81 = vmatpush1.bf16.msra.mxu0 %v71
    %82 = vmatprep.subr.bf16.mxu0 0
    %83 = vmatpush1.bf16.msra.mxu0 0
    %84 = vmatprep.subr.bf16.mxu0 0
    %85 = vmatpush1.bf16.msra.mxu0 0
    %86 = vmatprep.subr.bf16.mxu0 0
    %87 = vmatpush1.bf16.msra.mxu0 0
    %88 = vmatprep.subr.bf16.mxu0 0
    %89 = vmatpush1.bf16.msra.mxu0 0
    %90 = vmatprep.subr.bf16.mxu0 0
    %91 = vmatpush1.bf16.msra.mxu0 0
    %92 = vmatprep.subr.bf16.mxu0 0
    %93 = vmatpush1.bf16.msra.mxu0 0
    %94 = vmatprep.subr.bf16.mxu0 0
    %95 = vmatpush1.bf16.msra.mxu0 0
    %96 = vmatprep.subr.bf16.mxu0 0
    %97 = vmatpush1.bf16.msra.mxu0 0
    %98 = vmatprep.subr.bf16.mxu0 0
    %99 = vmatpush1.bf16.msra.mxu0 0
    %100 = vmatprep.subr.bf16.mxu0 0
    %101 = vmatpush1.bf16.msra.mxu0 0
    %102 = vmatprep.subr.bf16.mxu0 0
    %103 = vmatpush1.bf16.msra.mxu0 0
    %104 = vmatprep.subr.bf16.mxu0 0
    %105 = vmatpush1.bf16.msra.mxu0 0
    %106 = vmatprep.subr.bf16.mxu0 0
    %107 = vmatpush1.bf16.msra.mxu0 0
    %108 = vmatprep.subr.bf16.mxu0 0
    %109 = vmatpush1.bf16.msra.mxu0 0
    %110 = vmatprep.mubr.bf16.mxu0 0
    %111 = vmatmul.mubr.bf16.gmra.mrb[0].mxu0 %v76
    %v112 = vpop.f32.mrb[0].mxu0
    %v113 = vadd.f32 %v55, %v112
    %v114 = vpop.f32.mrb[0].mxu0
    %v115 = vpop.f32.mrb[0].mxu0
    %v116 = vadd.f32 %v55, %v115
    %v117 = vpop.f32.mrb[0].mxu0
    %118 = vdwg.mxu0
    %119 = vst.msk [vmem:[#allocation7] sm:$0xff] %vm74, %v113
    %120 = vst.msk [vmem:[#allocation7 + $0x8] sm:$0xff] %vm74, %v116
    // Predicated region
    $region22: #{tpu_custom_call.1} parent=1 // pred_check
      _
    $region23: #{tpu_custom_call.1} parent=1 // pred_check_branch
      %122 = sbr.rel (0) target = $region25
    $region24: #{tpu_custom_call.1} parent=1 // pred_region
      %s124 = ssub.s32 256, 256
      %125 = vsyncadd [#allocation4], %s124
      %s126 = sshll.u32 [#allocation7], 4
      %s127 = int_to_ptr.vmem [resolvable:$true] %s126
      %132 = dma.vmem_to_hbm [thread:$0]  %s127, 256, %s3, [#allocation4], 128, 128, 8
    $region25: #{tpu_custom_call.1} parent=1 // pred_fallthru
      _
    // Predicated region
    $region26: #{tpu_custom_call.1} parent=1 // pred_check
      _
    $region27: #{tpu_custom_call.1} parent=1 // pred_check_branch
      %134 = sbr.rel (0) target = $region29
    $region28: #{tpu_custom_call.1} parent=1 // pred_region
      %135 = dma.done [#allocation4], 256
    $region29: #{tpu_custom_call.1} parent=1 // pred_fallthru
      _
    %136 = vsyncpa [#allocation3], 1
    %137 = vsyncpa [#allocation6], 1
    %138 = vsyncpa [#allocation4], 1

</llo_original>
